<compile_context>
chip_gen: v7x
topology: tpu7x:2x2x1
jax: 0.10.0
libtpu: 0.0.40
codegen_flags: <defaults>
</compile_context>

<pallas_src>
import functools

import jax
import jax.numpy as jnp
from jax.experimental import pallas as pl
from jax.experimental.pallas import tpu as pltpu


def _focal_tversky_reduce_kernel(pred_ref, true_ref,
                                 tp_out, st_out, sp_out,
                                 tp_acc, st_acc, sp_acc):
    """Accumulate sum(t*sigmoid(p)), sum(t), sum(sigmoid(p)) over spatial tiles."""
    s = pl.program_id(1)

    @pl.when(s == 0)
    def _():
        tp_acc[...] = jnp.zeros_like(tp_acc)
        st_acc[...] = jnp.zeros_like(st_acc)
        sp_acc[...] = jnp.zeros_like(sp_acc)

    p = jax.nn.sigmoid(pred_ref[...].astype(jnp.float32))
    t = true_ref[...].astype(jnp.float32)

    tp_acc[...] += jnp.sum(t * p, axis=1, keepdims=True)
    st_acc[...] += jnp.sum(t, axis=1, keepdims=True)
    sp_acc[...] += jnp.sum(p, axis=1, keepdims=True)

    @pl.when(s == pl.num_programs(1) - 1)
    def _():
        tp_out[...] = tp_acc[...]
        st_out[...] = st_acc[...]
        sp_out[...] = sp_acc[...]


def _round_up(x, m):
    return -(-x // m) * m


def _choose_tiling(nc, s, bytes_per_elem_both_inputs):
    """Pick (nc_pad, tile_nc, s_pad, tile_s) under a conservative VMEM budget."""
    nc_pad = _round_up(nc, 8)
    if nc_pad > 256:
        tile_nc = 256
        nc_pad = _round_up(nc_pad, tile_nc)
    else:
        tile_nc = nc_pad

    # 2 pipeline buffers per input; 16 MiB budget fits the default scoped VMEM
    # on v6e/v7x and the raised (32 MiB) limit we request for v5e.
    budget = 16 * 1024 * 1024
    max_tile_s = budget // (2 * tile_nc * bytes_per_elem_both_inputs)
    tile_s = max(128, min(32 * 1024, (max_tile_s // 128) * 128))
    tile_s = min(tile_s, _round_up(s, 128))
    s_pad = _round_up(s, tile_s)
    return nc_pad, tile_nc, s_pad, tile_s


@functools.partial(jax.jit, static_argnames=("alpha", "beta", "gamma"))
def focal_tversky_loss(y_pred, y_true, alpha=0.7, beta=0.3, gamma=0.75):
    assert y_pred.shape == y_true.shape and y_pred.ndim == 5
    N, C, D, H, W = y_pred.shape
    NC = N * C
    S = D * H * W

    # Keep native dtypes: only cast non-float inputs (e.g. bool/int masks).
    pred2d = y_pred.reshape(NC, S)
    if not jnp.issubdtype(pred2d.dtype, jnp.floating):
        pred2d = pred2d.astype(jnp.float32)
    true2d = y_true.reshape(NC, S)
    if not jnp.issubdtype(true2d.dtype, jnp.floating):
        true2d = true2d.astype(jnp.bfloat16)

    bytes_per_elem = pred2d.dtype.itemsize + true2d.dtype.itemsize
    nc_pad, tile_nc, s_pad, tile_s = _choose_tiling(NC, S, bytes_per_elem)

    if nc_pad > NC or s_pad > S:
        # sigmoid(finfo.min) == 0, so padded spatial elements contribute
        # nothing to tp / sum_p; padded true is 0 so sum_t is untouched.
        neg = float(jnp.finfo(pred2d.dtype).min)
        pred2d = jnp.pad(pred2d, ((0, nc_pad - NC), (0, s_pad - S)),
                         constant_values=neg)
        true2d = jnp.pad(true2d, ((0, nc_pad - NC), (0, s_pad - S)),
                         constant_values=0)

    grid = (nc_pad // tile_nc, s_pad // tile_s)
    out_shape = jax.ShapeDtypeStruct((nc_pad, 1), jnp.float32)

    tp, st, sp = pl.pallas_call(
        _focal_tversky_reduce_kernel,
        out_shape=(out_shape, out_shape, out_shape),
        grid_spec=pltpu.PrefetchScalarGridSpec(
            num_scalar_prefetch=0,
            grid=grid,
            in_specs=[
                pl.BlockSpec((tile_nc, tile_s), lambda i, s: (i, s)),
                pl.BlockSpec((tile_nc, tile_s), lambda i, s: (i, s)),
            ],
            out_specs=[
                pl.BlockSpec((tile_nc, 1), lambda i, s: (i, 0)),
                pl.BlockSpec((tile_nc, 1), lambda i, s: (i, 0)),
                pl.BlockSpec((tile_nc, 1), lambda i, s: (i, 0)),
            ],
            scratch_shapes=[pltpu.VMEM((tile_nc, 1), jnp.float32)] * 3,
        ),
        compiler_params=pltpu.CompilerParams(
            dimension_semantics=("parallel", "arbitrary"),
            vmem_limit_bytes=32 * 1024 * 1024,
        ),
        cost_estimate=pl.CostEstimate(
            flops=4 * NC * S,
            transcendentals=NC * S,
            bytes_accessed=NC * S * bytes_per_elem + 3 * NC * 4,
        ),
    )(pred2d, true2d)

    tp = tp[:NC, 0].reshape(N, C)
    st = st[:NC, 0].reshape(N, C)
    sp = sp[:NC, 0].reshape(N, C)

    fn = st - tp          # sum(t * (1 - p))
    fp = sp - tp          # sum((1 - t) * p)
    # NOTE: matches the source module exactly -- no smoothing term.
    tversky_index = tp / (tp + alpha * fn + beta * fp)
    loss = jnp.power(1.0 - tversky_index, gamma)
    return jnp.mean(loss)


def _reference_loss(y_pred, y_true, alpha=0.7, beta=0.3, gamma=0.75):
    p = jax.nn.sigmoid(y_pred.astype(jnp.float32))
    t = y_true.astype(jnp.float32)
    tp = jnp.sum(t * p, axis=(2, 3, 4))
    fn = jnp.sum(t * (1.0 - p), axis=(2, 3, 4))
    fp = jnp.sum((1.0 - t) * p, axis=(2, 3, 4))
    ti = tp / (tp + alpha * fn + beta * fp)
    return jnp.mean(jnp.power(1.0 - ti, gamma))


if __name__ == "__main__":
    key = jax.random.PRNGKey(0)
    k1, k2, k3, k4 = jax.random.split(key, 4)

    # Case 1: nicely divisible NCDHW shape (batch=2, channels=4, 4x8x8 volume).
    N, C, D, H, W = 2, 4, 4, 8, 8
    y_pred = jax.random.normal(k1, (N, C, D, H, W), dtype=jnp.float32)
    y_true = (jax.random.uniform(k2, (N, C, D, H, W)) > 0.5).astype(jnp.float32)

    loss = focal_tversky_loss(y_pred, y_true)
    jax.block_until_ready(loss)
    ref = _reference_loss(y_pred, y_true)
    assert jnp.allclose(loss, ref, rtol=1e-5, atol=1e-6), (loss, ref)

    # Case 2: awkward shape exercising the pad/mask path (NC=3, S=105).
    N2, C2, D2, H2, W2 = 1, 3, 3, 5, 7
    yp2 = jax.random.normal(k3, (N2, C2, D2, H2, W2), dtype=jnp.float32)
    yt2 = (jax.random.uniform(k4, (N2, C2, D2, H2, W2)) > 0.5).astype(jnp.float32)

    loss2 = focal_tversky_loss(yp2, yt2)
    jax.block_until_ready(loss2)
    ref2 = _reference_loss(yp2, yt2)
    assert jnp.allclose(loss2, ref2, rtol=1e-5, atol=1e-6), (loss2, ref2)

    print("KERNEL_OK")
</pallas_src>

<mosaic_0001>
module attributes {stable_mosaic.version = 11 : i64} {
  func.func @_focal_tversky_reduce_kernel(%arg0: i32, %arg1: i32, %arg2: memref<8x256xf32, #tpu.memory_space<vmem>>, %arg3: memref<8x256xf32, #tpu.memory_space<vmem>>, %arg4: memref<8x1xf32, #tpu.memory_space<vmem>>, %arg5: memref<8x1xf32, #tpu.memory_space<vmem>>, %arg6: memref<8x1xf32, #tpu.memory_space<vmem>>, %arg7: memref<8x1xf32, #tpu.memory_space<vmem>>, %arg8: memref<8x1xf32, #tpu.memory_space<vmem>>, %arg9: memref<8x1xf32, #tpu.memory_space<vmem>>) attributes {dimension_semantics = [#tpu.dimension_semantics<parallel>, #tpu.dimension_semantics<arbitrary>], iteration_bounds = array<i64: 1, 1>, scalar_prefetch = 0 : i64, scratch_operands = 3 : i64, tpu.core_type = #tpu.core_type<tc>, window_params = [{transform_indices = @transform_0, window_bounds = array<i64: 8, 256>}, {transform_indices = @transform_1, window_bounds = array<i64: 8, 256>}, {transform_indices = @transform_2, window_bounds = array<i64: 8, 1>}, {transform_indices = @transform_3, window_bounds = array<i64: 8, 1>}, {transform_indices = @transform_4, window_bounds = array<i64: 8, 1>}]} {
    %c0_i32 = arith.constant 0 : i32
    %0 = arith.cmpi eq, %arg1, %c0_i32 : i32
    %1 = arith.extui %0 : i1 to i32
    %c0_i32_0 = arith.constant 0 : i32
    %2 = arith.cmpi ne, %1, %c0_i32_0 : i32
    scf.if %2 {
      %cst_21 = arith.constant 0.000000e+00 : f32
      %29 = vector.broadcast %cst_21 : f32 to vector<8x1xf32>
      %c0_22 = arith.constant 0 : index
      %c0_23 = arith.constant 0 : index
      %30 = vector.load %arg7[%c0_22, %c0_23] : memref<8x1xf32, #tpu.memory_space<vmem>>, vector<8x1xf32>
      tpu.vector_store %arg7[%c0_22, %c0_23], %29 {strides = array<i32>} : memref<8x1xf32, #tpu.memory_space<vmem>>, vector<8x1xf32>,
      %cst_24 = arith.constant 0.000000e+00 : f32
      %31 = vector.broadcast %cst_24 : f32 to vector<8x1xf32>
      %c0_25 = arith.constant 0 : index
      %c0_26 = arith.constant 0 : index
      %32 = vector.load %arg8[%c0_25, %c0_26] : memref<8x1xf32, #tpu.memory_space<vmem>>, vector<8x1xf32>
      tpu.vector_store %arg8[%c0_25, %c0_26], %31 {strides = array<i32>} : memref<8x1xf32, #tpu.memory_space<vmem>>, vector<8x1xf32>,
      %cst_27 = arith.constant 0.000000e+00 : f32
      %33 = vector.broadcast %cst_27 : f32 to vector<8x1xf32>
      %c0_28 = arith.constant 0 : index
      %c0_29 = arith.constant 0 : index
      %34 = vector.load %arg9[%c0_28, %c0_29] : memref<8x1xf32, #tpu.memory_space<vmem>>, vector<8x1xf32>
      tpu.vector_store %arg9[%c0_28, %c0_29], %33 {strides = array<i32>} : memref<8x1xf32, #tpu.memory_space<vmem>>, vector<8x1xf32>,
    } else {
    }
    %c0 = arith.constant 0 : index
    %c0_1 = arith.constant 0 : index
    %3 = vector.load %arg2[%c0, %c0_1] : memref<8x256xf32, #tpu.memory_space<vmem>>, vector<8x256xf32>
    %4 = arith.negf %3 : vector<8x256xf32>
    %5 = math.exp %4 : vector<8x256xf32>
    %cst = arith.constant 1.000000e+00 : f32
    %6 = vector.broadcast %cst : f32 to vector<8x256xf32>
    %7 = arith.addf %6, %5 : vector<8x256xf32>
    %8 = arith.divf %6, %7 : vector<8x256xf32>
    %c0_2 = arith.constant 0 : index
    %c0_3 = arith.constant 0 : index
    %9 = vector.load %arg3[%c0_2, %c0_3] : memref<8x256xf32, #tpu.memory_space<vmem>>, vector<8x256xf32>
    %c0_4 = arith.constant 0 : index
    %c0_5 = arith.constant 0 : index
    %10 = vector.load %arg7[%c0_4, %c0_5] : memref<8x1xf32, #tpu.memory_space<vmem>>, vector<8x1xf32>
    %11 = arith.mulf %9, %8 : vector<8x256xf32>
    %cst_6 = arith.constant dense<0.000000e+00> : vector<8xf32>
    %12 = vector.multi_reduction <add>, %11, %cst_6 [1] : vector<8x256xf32> to vector<8xf32>
    %13 = vector.shape_cast %12 : vector<8xf32> to vector<8x1xf32>
    %14 = arith.addf %10, %13 : vector<8x1xf32>
    %c0_7 = arith.constant 0 : index
    %c0_8 = arith.constant 0 : index
    %15 = vector.load %arg7[%c0_7, %c0_8] : memref<8x1xf32, #tpu.memory_space<vmem>>, vector<8x1xf32>
    tpu.vector_store %arg7[%c0_7, %c0_8], %14 {strides = array<i32>} : memref<8x1xf32, #tpu.memory_space<vmem>>, vector<8x1xf32>,
    %c0_9 = arith.constant 0 : index
    %c0_10 = arith.constant 0 : index
    %16 = vector.load %arg8[%c0_9, %c0_10] : memref<8x1xf32, #tpu.memory_space<vmem>>, vector<8x1xf32>
    %cst_11 = arith.constant dense<0.000000e+00> : vector<8xf32>
    %17 = vector.multi_reduction <add>, %9, %cst_11 [1] : vector<8x256xf32> to vector<8xf32>
    %18 = vector.shape_cast %17 : vector<8xf32> to vector<8x1xf32>
    %19 = arith.addf %16, %18 : vector<8x1xf32>
    %c0_12 = arith.constant 0 : index
    %c0_13 = arith.constant 0 : index
    %20 = vector.load %arg8[%c0_12, %c0_13] : memref<8x1xf32, #tpu.memory_space<vmem>>, vector<8x1xf32>
    tpu.vector_store %arg8[%c0_12, %c0_13], %19 {strides = array<i32>} : memref<8x1xf32, #tpu.memory_space<vmem>>, vector<8x1xf32>,
    %c0_14 = arith.constant 0 : index
    %c0_15 = arith.constant 0 : index
    %21 = vector.load %arg9[%c0_14, %c0_15] : memref<8x1xf32, #tpu.memory_space<vmem>>, vector<8x1xf32>
    %cst_16 = arith.constant dense<0.000000e+00> : vector<8xf32>
    %22 = vector.multi_reduction <add>, %8, %cst_16 [1] : vector<8x256xf32> to vector<8xf32>
    %23 = vector.shape_cast %22 : vector<8xf32> to vector<8x1xf32>
    %24 = arith.addf %21, %23 : vector<8x1xf32>
    %c0_17 = arith.constant 0 : index
    %c0_18 = arith.constant 0 : index
    %25 = vector.load %arg9[%c0_17, %c0_18] : memref<8x1xf32, #tpu.memory_space<vmem>>, vector<8x1xf32>
    tpu.vector_store %arg9[%c0_17, %c0_18], %24 {strides = array<i32>} : memref<8x1xf32, #tpu.memory_space<vmem>>, vector<8x1xf32>,
    %c0_i32_19 = arith.constant 0 : i32
    %26 = arith.cmpi eq, %arg1, %c0_i32_19 : i32
    %27 = arith.extui %26 : i1 to i32
    %c0_i32_20 = arith.constant 0 : i32
    %28 = arith.cmpi ne, %27, %c0_i32_20 : i32
    scf.if %28 {
      %c0_21 = arith.constant 0 : index
      %c0_22 = arith.constant 0 : index
      %29 = vector.load %arg7[%c0_21, %c0_22] : memref<8x1xf32, #tpu.memory_space<vmem>>, vector<8x1xf32>
      %c0_23 = arith.constant 0 : index
      %c0_24 = arith.constant 0 : index
      %30 = vector.load %arg4[%c0_23, %c0_24] : memref<8x1xf32, #tpu.memory_space<vmem>>, vector<8x1xf32>
      tpu.vector_store %arg4[%c0_23, %c0_24], %29 {strides = array<i32>} : memref<8x1xf32, #tpu.memory_space<vmem>>, vector<8x1xf32>,
      %c0_25 = arith.constant 0 : index
      %c0_26 = arith.constant 0 : index
      %31 = vector.load %arg8[%c0_25, %c0_26] : memref<8x1xf32, #tpu.memory_space<vmem>>, vector<8x1xf32>
      %c0_27 = arith.constant 0 : index
      %c0_28 = arith.constant 0 : index
      %32 = vector.load %arg5[%c0_27, %c0_28] : memref<8x1xf32, #tpu.memory_space<vmem>>, vector<8x1xf32>
      tpu.vector_store %arg5[%c0_27, %c0_28], %31 {strides = array<i32>} : memref<8x1xf32, #tpu.memory_space<vmem>>, vector<8x1xf32>,
      %c0_29 = arith.constant 0 : index
      %c0_30 = arith.constant 0 : index
      %33 = vector.load %arg9[%c0_29, %c0_30] : memref<8x1xf32, #tpu.memory_space<vmem>>, vector<8x1xf32>
      %c0_31 = arith.constant 0 : index
      %c0_32 = arith.constant 0 : index
      %34 = vector.load %arg6[%c0_31, %c0_32] : memref<8x1xf32, #tpu.memory_space<vmem>>, vector<8x1xf32>
      tpu.vector_store %arg6[%c0_31, %c0_32], %33 {strides = array<i32>} : memref<8x1xf32, #tpu.memory_space<vmem>>, vector<8x1xf32>,
    } else {
    }
    return
  }
  func.func @transform_0(%arg0: i32, %arg1: i32) -> (i32, i32) {
    %c0_i32 = arith.constant 0 : i32
    return %arg0, %arg1 : i32, i32
  }
  func.func @transform_1(%arg0: i32, %arg1: i32) -> (i32, i32) {
    %c0_i32 = arith.constant 0 : i32
    return %arg0, %arg1 : i32, i32
  }
  func.func @transform_2(%arg0: i32, %arg1: i32) -> (i32, i32) {
    %c0_i32 = arith.constant 0 : i32
    %c0_i32_0 = arith.constant 0 : i32
    return %arg0, %c0_i32 : i32, i32
  }
  func.func @transform_3(%arg0: i32, %arg1: i32) -> (i32, i32) {
    %c0_i32 = arith.constant 0 : i32
    %c0_i32_0 = arith.constant 0 : i32
    return %arg0, %c0_i32 : i32, i32
  }
  func.func @transform_4(%arg0: i32, %arg1: i32) -> (i32, i32) {
    %c0_i32 = arith.constant 0 : i32
    %c0_i32_0 = arith.constant 0 : i32
    return %arg0, %c0_i32 : i32, i32
  }
}

</mosaic_0001>

<llo_original>
// kernel: focal_tversky_loss.1
$region0: #{focal_tversky_loss.1}
  #allocation0 [shape = 'u32[]', space=smem, size = 0x4, offset = 0x4, fixed_abs, tag = 'smem constant byte address 0x4 - core index']
  #allocation1 [shape = 'u32[144,128]{1,0:T(1,128)}', space=vmem, size = 0x12000, scoped, tag = 'internal scratch']
  #allocation2 [shape = 'f32[8,1]{1,0:T(8,128)}', space=vmem, size = 0x1000, scoped, tag = 'scratch operand']
  #allocation3 [shape = 'f32[8,1]{1,0:T(8,128)}', space=vmem, size = 0x1000, scoped, tag = 'scratch operand']
  #allocation4 [shape = 'f32[8,1]{1,0:T(8,128)}', space=vmem, size = 0x1000, scoped, tag = 'scratch operand']
  %s0 = inlined_call_operand.vmem [shape: f32[8,256], index: 0, kind: input, shape index: {}]
  %s1 = inlined_call_operand.vmem [shape: f32[8,256], index: 1, kind: input, shape index: {}]
  %s2 = inlined_call_operand.vmem [shape: f32[8,1], index: 2, kind: output, shape index: {0}]
  %s3 = inlined_call_operand.vmem [shape: f32[8,1], index: 3, kind: output, shape index: {1}]
  %s4 = inlined_call_operand.vmem [shape: f32[8,1], index: 4, kind: output, shape index: {2}]
  %5 = xla_tuple %s2, %s3, %s4
  %s6 = sld [smem:[#allocation0]]
  $region42: #{focal_tversky_loss.1} parent=0
    _
  %s8 = ssub.s32 1, %s6
  %s9 = scalar_select 0, %s8, %s6
  // Predicated region
  $region2: #{focal_tversky_loss.1} parent=0 // pred_check
    _
  $region3: #{focal_tversky_loss.1} parent=0 // pred_check_branch
    %11 = sbr.rel (0) target = $region5
  $region4: #{focal_tversky_loss.1} parent=0 // pred_region
    _
  $region5: #{focal_tversky_loss.1} parent=0 // pred_fallthru
    _
  // Predicated region
  $region6: #{focal_tversky_loss.1} parent=0 // pred_check
    _
  $region7: #{focal_tversky_loss.1} parent=0 // pred_check_branch
    %13 = sbr.rel (0) target = $region9
  $region8: #{focal_tversky_loss.1} parent=0 // pred_region
    _
  $region9: #{focal_tversky_loss.1} parent=0 // pred_fallthru
    _
  %p14 = scmp.eq.s32.totalorder 0, 0
  // Predicated region
  $region10: #{focal_tversky_loss.1} parent=0 // pred_check
    %p15 = pneg %p14
  $region11: #{focal_tversky_loss.1} parent=0 // pred_check_branch
    %17 = sbr.rel (%p15) target = $region13
  $region12: #{focal_tversky_loss.1} parent=0 // pred_region
    %vm18 = vcmask 7168
    %19 = vst.msk [vmem:[#allocation2] sm:$0xff] %vm18, 0.0
    %20 = vst.msk [vmem:[#allocation3] sm:$0xff] %vm18, 0.0
    %21 = vst.msk [vmem:[#allocation4] sm:$0xff] %vm18, 0.0
  $region13: #{focal_tversky_loss.1} parent=0 // pred_fallthru
    _
  %v22 = vld [vmem:[%s0] sm:$0xff]
  %v23 = vld [vmem:[%s0 + $0x8] sm:$0xff]
  %v24 = vxor.u32 %v22, 2147483648
  %v25 = vxor.u32 %v23, 2147483648
  %v26 = vmul.f32 %v24, 1.442695
  %v27 = vpow.pop %v26
  %v28 = vmul.f32 %v25, 1.442695
  %v29 = vpow.pop %v28
  %v30 = vadd.f32 %v27, 1.0
  %v31 = vadd.f32 %v29, 1.0
  %v32 = vrcp.pop %v30
  %v33 = vmul.f32 1.0, %v32
  %v34 = vrcp.pop %v31
  %v35 = vmul.f32 1.0, %v34
  %v36 = vld [vmem:[%s1] sm:$0xff]
  %v37 = vld [vmem:[%s1 + $0x8] sm:$0xff]
  %v38 = vld [vmem:[#allocation2] sm:$0xff]
  %v39 = vmul.f32 %v36, %v33
  %v40 = vmul.f32 %v37, %v35
  %v41 = vadd.f32 %v39, %v40
  %42 = vadd.xlane.f32.xlu0 %v41
  %v43 = vpop.xlane.xlu0 %42
  %v44 = vadd.f32 %v38, %v43
  %vm45 = vcmask 7168
  %46 = vst.msk [vmem:[#allocation2] sm:$0xff] %vm45, %v44
  %v47 = vld [vmem:[#allocation3] sm:$0xff]
  %v48 = vadd.f32 %v36, %v37
  %49 = vadd.xlane.f32.xlu0 %v48
  %v50 = vpop.xlane.xlu0 %49
  %v51 = vadd.f32 %v47, %v50
  %52 = vst.msk [vmem:[#allocation3] sm:$0xff] %vm45, %v51
  %v53 = vld [vmem:[#allocation4] sm:$0xff]
  %v54 = vadd.f32 %v33, %v35
  %55 = vadd.xlane.f32.xlu0 %v54
  %v56 = vpop.xlane.xlu0 %55
  %v57 = vadd.f32 %v53, %v56
  %58 = vst.msk [vmem:[#allocation4] sm:$0xff] %vm45, %v57
  // Predicated region
  $region14: #{focal_tversky_loss.1} parent=0 // pred_check
    %p59 = pneg %p14
  $region15: #{focal_tversky_loss.1} parent=0 // pred_check_branch
    %61 = sbr.rel (%p59) target = $region17
  $region16: #{focal_tversky_loss.1} parent=0 // pred_region
    %v62 = vld [vmem:[#allocation2] sm:$0xff]
    %63 = vst.msk [vmem:[%s2] sm:$0xff] %vm45, %v62
    %v64 = vld [vmem:[#allocation3] sm:$0xff]
    %65 = vst.msk [vmem:[%s3] sm:$0xff] %vm45, %v64
    %v66 = vld [vmem:[#allocation4] sm:$0xff]
    %67 = vst.msk [vmem:[%s4] sm:$0xff] %vm45, %v66
  $region17: #{focal_tversky_loss.1} parent=0 // pred_fallthru
    _
  // Predicated region
  $region18: #{focal_tversky_loss.1} parent=0 // pred_check
    _
  $region19: #{focal_tversky_loss.1} parent=0 // pred_check_branch
    %69 = sbr.rel (0) target = $region21
  $region20: #{focal_tversky_loss.1} parent=0 // pred_region
    _
  $region21: #{focal_tversky_loss.1} parent=0 // pred_fallthru
    _
  // Predicated region
  $region22: #{focal_tversky_loss.1} parent=0 // pred_check
    _
  $region23: #{focal_tversky_loss.1} parent=0 // pred_check_branch
    %71 = sbr.rel (0) target = $region25
  $region24: #{focal_tversky_loss.1} parent=0 // pred_region
    _
  $region25: #{focal_tversky_loss.1} parent=0 // pred_fallthru
    _
  // Predicated region
  $region26: #{focal_tversky_loss.1} parent=0 // pred_check
    _
  $region27: #{focal_tversky_loss.1} parent=0 // pred_check_branch
    %73 = sbr.rel (0) target = $region29
  $region28: #{focal_tversky_loss.1} parent=0 // pred_region
    _
  $region29: #{focal_tversky_loss.1} parent=0 // pred_fallthru
    _
  // Predicated region
  $region30: #{focal_tversky_loss.1} parent=0 // pred_check
    _
  $region31: #{focal_tversky_loss.1} parent=0 // pred_check_branch
    %75 = sbr.rel (0) target = $region33
  $region32: #{focal_tversky_loss.1} parent=0 // pred_region
    _
  $region33: #{focal_tversky_loss.1} parent=0 // pred_fallthru
    _
  // Predicated region
  $region34: #{focal_tversky_loss.1} parent=0 // pred_check
    _
  $region35: #{focal_tversky_loss.1} parent=0 // pred_check_branch
    %77 = sbr.rel (0) target = $region37
  $region36: #{focal_tversky_loss.1} parent=0 // pred_region
    _
  $region37: #{focal_tversky_loss.1} parent=0 // pred_fallthru
    _
  // Predicated region
  $region38: #{focal_tversky_loss.1} parent=0 // pred_check
    _
  $region39: #{focal_tversky_loss.1} parent=0 // pred_check_branch
    %79 = sbr.rel (0) target = $region41
  $region40: #{focal_tversky_loss.1} parent=0 // pred_region
    _
  $region41: #{focal_tversky_loss.1} parent=0 // pred_fallthru
    _

</llo_original>
